<compile_context>
chip_gen: v5e
topology: v5e:2x2
jax: 0.10.0
libtpu: 0.0.40
codegen_flags: <defaults>
</compile_context>

<pallas_src>
import functools

import jax
import jax.numpy as jnp
from jax.experimental import pallas as pl
from jax.experimental.pallas import tpu as pltpu

_TILE_ELEMS = 512 * 512      # max elements per block (1 MiB in f32)


def _pick_lanes(n):
    """Pick a lane width that divides n (no pad) if possible."""
    for w in (512, 256, 128):
        if n % w == 0:
            return w, 0
    return 128, (-n) % 128    # minimal pad; only when n % 128 != 0


def _detect_num_tensorcores():
    """2 TensorCores per device only on megacore chips (v4 / v5p / v7x)."""
    try:
        kind = jax.devices()[0].device_kind.lower().replace(" ", "")
    except Exception:
        return 1
    if any(tag in kind for tag in ("v2", "v3", "v5lite", "v5e", "v6lite", "v6e")):
        return 1
    if any(tag in kind for tag in ("v4", "v5p", "v7")):
        return 2
    return 1


def _int_pow(p, g):
    """p ** g for small non-negative integer g, via square-and-multiply (VPU)."""
    if g == 0:
        return jnp.ones_like(p)
    result, base = None, p
    while g:
        if g & 1:
            result = base if result is None else result * base
        g >>= 1
        if g:
            base = base * base
    return result


def _mixed_loss_kernel(x_ref, t_ref, out_ref, acc_f, acc_i, acc_st, *,
                       n_full_rows, n_rem, gamma, gamma_int, steps, tile_rows,
                       acc_rows, lanes, needs_mask, binary_target):
    c = pl.program_id(0)
    i = pl.program_id(1)

    @pl.when(i == 0)
    def _init():
        acc_f[...] = jnp.zeros_like(acc_f)
        acc_i[...] = jnp.zeros_like(acc_i)
        acc_st[...] = jnp.zeros_like(acc_st)

    x = x_ref[...].astype(jnp.float32)
    t = t_ref[...].astype(jnp.float32)

    # Stable BCE-with-logits pieces: L = log(1 + exp(-|x|)) (2 EUP ops).
    e = jnp.exp(-jnp.abs(x))
    L = jnp.log1p(e)
    max_val = jnp.maximum(-x, 0.0)
    bce = x - x * t + max_val + L
    # sigmoid(x) reusing e -> no extra exp, exact divide (tolerance-safe).
    s = jnp.where(x >= 0.0, 1.0, e) / (1.0 + e)

    inter_el = s * t                      # dice intersection terms
    st_el = s + t                         # dice denominator terms

    # Focal modulation w = exp(gamma * logsigmoid(-x*(2t-1))).
    if binary_target:
        if gamma_int:
            p = st_el - 2.0 * inter_el    # == exp(logsigmoid(-x*(2t-1))) for t in {0,1}
            w = _int_pow(p, int(gamma))   # pure VPU multiplies
        else:
            invprobs = jnp.minimum(x * (1.0 - 2.0 * t), 0.0) - L   # |z| == |x| for binary t
            w = jnp.exp(gamma * invprobs)
    else:
        z = -x * (2.0 * t - 1.0)
        invprobs = jnp.minimum(z, 0.0) - jnp.log1p(jnp.exp(-jnp.abs(z)))
        w = jnp.exp(gamma * invprobs)
    focal_el = w * bce

    def reduce_blk(v):
        # Tile-aligned reshape (sublane/lane dims preserved -> no relayout)
        # followed by a cross-vreg VPU sum down to (acc_rows, lanes).
        if tile_rows == acc_rows:
            return v
        return v.reshape(tile_rows // acc_rows, acc_rows, lanes).sum(axis=0)

    def accumulate(fv, iv, sv):
        acc_f[...] += reduce_blk(fv)
        acc_i[...] += reduce_blk(iv)
        acc_st[...] += reduce_blk(sv)

    if needs_mask:
        blk = c * steps + i                       # logical (unclamped) block index
        base = blk * tile_rows                    # first logical row of this block
        fully_valid = base + tile_rows <= n_full_rows

        @pl.when(fully_valid)
        def _fast():
            accumulate(focal_el, inter_el, st_el)

        @pl.when(jnp.logical_not(fully_valid))
        def _masked():
            # Row/col comparison (no row*lanes+col multiply -> no int32 overflow).
            row_ids = base + jax.lax.broadcasted_iota(jnp.int32, (tile_rows, lanes), 0)
            col_ids = jax.lax.broadcasted_iota(jnp.int32, (tile_rows, lanes), 1)
            valid = (row_ids < n_full_rows) | ((row_ids == n_full_rows) & (col_ids < n_rem))
            zero = jnp.zeros((), jnp.float32)
            accumulate(jnp.where(valid, focal_el, zero),
                       jnp.where(valid, inter_el, zero),
                       jnp.where(valid, st_el, zero))
    else:
        accumulate(focal_el, inter_el, st_el)

    # Single cross-lane (XLU) reduction per core, on the final step only.
    @pl.when(i == pl.num_programs(1) - 1)
    def _finalize():
        f_sum = jnp.sum(acc_f[...])
        i_sum = jnp.sum(acc_i[...])
        st_sum = jnp.sum(acc_st[...])
        lane_row = jax.lax.broadcasted_iota(jnp.int32, (1, 8, 128), 1)
        out_ref[...] = jnp.where(
            lane_row == 0, f_sum,
            jnp.where(lane_row == 1, i_sum,
                      jnp.where(lane_row == 2, st_sum, 0.0)))


def mixed_loss(x, target, *, alpha, gamma, assume_binary_target=True):
    assert x.shape == target.shape, (x.shape, target.shape)
    n = x.size
    assert n > 0

    lanes, pad = _pick_lanes(n)
    rows = (n + pad) // lanes
    tile_rows = min(rows, _TILE_ELEMS // lanes)     # full-dim block or 512x512-elem tile
    acc_rows = 8 if tile_rows % 8 == 0 else tile_rows
    nblocks = pl.cdiv(rows, tile_rows)
    ncores = max(1, min(_detect_num_tensorcores(), nblocks))
    steps = pl.cdiv(nblocks, ncores)
    needs_mask = (n % lanes != 0) or (steps * ncores * tile_rows != rows)

    def prep(a):
        a = a.reshape(-1)
        if a.dtype not in (jnp.float32, jnp.bfloat16, jnp.float16):
            a = a.astype(jnp.float32)             # ints/bools/f64 -> f32
        elif a.dtype != jnp.float32:
            # Sub-32-bit packing guard: tiny full-dim blocks whose sublane count
            # isn't a multiple of the packing get upcast (negligible cost).
            packing = 4 // a.dtype.itemsize
            if tile_rows % (8 * packing) != 0:
                a = a.astype(jnp.float32)
        if pad:
            # Only when n % 128 != 0; an exact-fit reshape is otherwise free.
            a = jnp.pad(a, (0, pad))
        return a.reshape(rows, lanes)

    x2 = prep(x)
    t2 = prep(target)

    gamma_f = float(gamma)
    gamma_int = gamma_f.is_integer() and 0.0 <= gamma_f <= 16.0

    def data_map(c, i):
        blk = c * steps + i
        # Clamp over-covering block indices (duplicated data is fully masked
        # in-kernel via the logical index, so nothing is double counted).
        return jnp.minimum(blk, nblocks - 1), 0

    kernel = functools.partial(
        _mixed_loss_kernel,
        n_full_rows=n // lanes, n_rem=n % lanes,
        gamma=gamma_f, gamma_int=gamma_int,
        steps=steps, tile_rows=tile_rows, acc_rows=acc_rows, lanes=lanes,
        needs_mask=needs_mask, binary_target=assume_binary_target)

    partials = pl.pallas_call(
        kernel,
        out_shape=jax.ShapeDtypeStruct((ncores, 8, 128), jnp.float32),
        grid_spec=pltpu.PrefetchScalarGridSpec(
            num_scalar_prefetch=0,
            grid=(ncores, steps),
            in_specs=[
                pl.BlockSpec((tile_rows, lanes), data_map),
                pl.BlockSpec((tile_rows, lanes), data_map),
            ],
            out_specs=pl.BlockSpec((1, 8, 128), lambda c, i: (c, 0, 0)),
            scratch_shapes=[pltpu.VMEM((acc_rows, lanes), jnp.float32)] * 3,
        ),
        compiler_params=pltpu.CompilerParams(
            dimension_semantics=("parallel", "arbitrary")),
    )(x2, t2)

    sums = jnp.sum(partials[:, :3, 0], axis=0)       # combine per-core partials
    focal_mean = sums[0] / jnp.float32(n)
    smooth = jnp.float32(1.0)
    dice = (2.0 * sums[1] + smooth) / (sums[2] + smooth)
    # MixedLoss.forward: alpha * focal - log(dice); final .mean() is a no-op on a scalar.
    return alpha * focal_mean - jnp.log(dice)


def _mixed_loss_ref(x, target, *, alpha, gamma):
    x = x.astype(jnp.float32).reshape(-1)
    t = target.astype(jnp.float32).reshape(-1)
    max_val = jnp.maximum(-x, 0.0)
    bce = x - x * t + max_val + jnp.log(jnp.exp(-max_val) + jnp.exp(-x - max_val))
    invprobs = jax.nn.log_sigmoid(-x * (t * 2.0 - 1.0))
    focal = jnp.mean(jnp.exp(invprobs * gamma) * bce)
    s = jax.nn.sigmoid(x)
    dice = (2.0 * jnp.sum(s * t) + 1.0) / (jnp.sum(s) + jnp.sum(t) + 1.0)
    return alpha * focal - jnp.log(dice)


if __name__ == "__main__":
    # MixedLoss(alpha, gamma) hyperparameters (deterministic, in-script)
    alpha, gamma = 10.0, 2.0

    key = jax.random.PRNGKey(0)
    kx, kt = jax.random.split(key)
    # Layout: NCHW, as in the PyTorch module (binary segmentation target).
    # Target is created as bf16 (exact for 0/1) to exercise the low-bandwidth
    # input path; logits stay f32.
    x = jax.random.normal(kx, (2, 4, 16, 16), dtype=jnp.float32)
    target = jax.random.bernoulli(kt, 0.3, (2, 4, 16, 16)).astype(jnp.bfloat16)

    out = mixed_loss(x, target, alpha=alpha, gamma=gamma)
    out = jax.block_until_ready(out)

    ref = _mixed_loss_ref(x, target, alpha=alpha, gamma=gamma)
    assert jnp.allclose(out, ref, rtol=1e-5, atol=1e-5), (out, ref)
    print("KERNEL_OK")
</pallas_src>

<mosaic_0001>
module attributes {stable_mosaic.version = 11 : i64} {
  func.func @_mixed_loss_kernel(%arg0: i32, %arg1: i32, %arg2: memref<4x512xf32, #tpu.memory_space<vmem>>, %arg3: memref<4x512xf32, #tpu.memory_space<vmem>>, %arg4: memref<1x8x128xf32, #tpu.memory_space<vmem>>, %arg5: memref<4x512xf32, #tpu.memory_space<vmem>>, %arg6: memref<4x512xf32, #tpu.memory_space<vmem>>, %arg7: memref<4x512xf32, #tpu.memory_space<vmem>>) attributes {dimension_semantics = [#tpu.dimension_semantics<parallel>, #tpu.dimension_semantics<arbitrary>], iteration_bounds = array<i64: 1, 1>, scalar_prefetch = 0 : i64, scratch_operands = 3 : i64, tpu.core_type = #tpu.core_type<tc>, window_params = [{transform_indices = @transform_0, window_bounds = array<i64: 4, 512>}, {transform_indices = @transform_1, window_bounds = array<i64: 4, 512>}, {transform_indices = @transform_2, window_bounds = array<i64: 1, 8, 128>}]} {
    %c0_i32 = arith.constant 0 : i32
    %0 = arith.cmpi eq, %arg1, %c0_i32 : i32
    %1 = arith.extui %0 : i1 to i32
    %c0_i32_0 = arith.constant 0 : i32
    %2 = arith.cmpi ne, %1, %c0_i32_0 : i32
    scf.if %2 {
      %cst_24 = arith.constant 0.000000e+00 : f32
      %44 = vector.broadcast %cst_24 : f32 to vector<4x512xf32>
      %c0_25 = arith.constant 0 : index
      %c0_26 = arith.constant 0 : index
      %45 = vector.load %arg5[%c0_25, %c0_26] : memref<4x512xf32, #tpu.memory_space<vmem>>, vector<4x512xf32>
      tpu.vector_store %arg5[%c0_25, %c0_26], %44 {strides = array<i32>} : memref<4x512xf32, #tpu.memory_space<vmem>>, vector<4x512xf32>,
      %cst_27 = arith.constant 0.000000e+00 : f32
      %46 = vector.broadcast %cst_27 : f32 to vector<4x512xf32>
      %c0_28 = arith.constant 0 : index
      %c0_29 = arith.constant 0 : index
      %47 = vector.load %arg6[%c0_28, %c0_29] : memref<4x512xf32, #tpu.memory_space<vmem>>, vector<4x512xf32>
      tpu.vector_store %arg6[%c0_28, %c0_29], %46 {strides = array<i32>} : memref<4x512xf32, #tpu.memory_space<vmem>>, vector<4x512xf32>,
      %cst_30 = arith.constant 0.000000e+00 : f32
      %48 = vector.broadcast %cst_30 : f32 to vector<4x512xf32>
      %c0_31 = arith.constant 0 : index
      %c0_32 = arith.constant 0 : index
      %49 = vector.load %arg7[%c0_31, %c0_32] : memref<4x512xf32, #tpu.memory_space<vmem>>, vector<4x512xf32>
      tpu.vector_store %arg7[%c0_31, %c0_32], %48 {strides = array<i32>} : memref<4x512xf32, #tpu.memory_space<vmem>>, vector<4x512xf32>,
    } else {
    }
    %c0 = arith.constant 0 : index
    %c0_1 = arith.constant 0 : index
    %3 = vector.load %arg2[%c0, %c0_1] : memref<4x512xf32, #tpu.memory_space<vmem>>, vector<4x512xf32>
    %c0_2 = arith.constant 0 : index
    %c0_3 = arith.constant 0 : index
    %4 = vector.load %arg3[%c0_2, %c0_3] : memref<4x512xf32, #tpu.memory_space<vmem>>, vector<4x512xf32>
    %5 = math.absf %3 : vector<4x512xf32>
    %cst = arith.constant 0.000000e+00 : f32
    %6 = vector.broadcast %cst : f32 to vector<4x512xf32>
    %7 = arith.subf %6, %5 : vector<4x512xf32>
    %8 = math.exp %7 : vector<4x512xf32>
    %9 = math.log1p %8 : vector<4x512xf32>
    %cst_4 = arith.constant 0.000000e+00 : f32
    %10 = vector.broadcast %cst_4 : f32 to vector<4x512xf32>
    %11 = arith.subf %10, %3 : vector<4x512xf32>
    %cst_5 = arith.constant 0.000000e+00 : f32
    %12 = vector.broadcast %cst_5 : f32 to vector<4x512xf32>
    %13 = arith.maximumf %11, %12 : vector<4x512xf32>
    %14 = arith.mulf %3, %4 : vector<4x512xf32>
    %15 = arith.subf %3, %14 : vector<4x512xf32>
    %16 = arith.addf %15, %13 : vector<4x512xf32>
    %17 = arith.addf %16, %9 : vector<4x512xf32>
    %cst_6 = arith.constant 0.000000e+00 : f32
    %18 = vector.broadcast %cst_6 : f32 to vector<4x512xf32>
    %19 = arith.cmpf oge, %3, %18 : vector<4x512xf32>
    %cst_7 = arith.constant 1.000000e+00 : f32
    %20 = vector.broadcast %cst_7 : f32 to vector<4x512xf32>
    %21 = arith.select %19, %20, %8 : vector<4x512xi1>, vector<4x512xf32>
    %cst_8 = arith.constant 1.000000e+00 : f32
    %22 = vector.broadcast %cst_8 : f32 to vector<4x512xf32>
    %23 = arith.addf %22, %8 : vector<4x512xf32>
    %24 = arith.divf %21, %23 : vector<4x512xf32>
    %25 = arith.mulf %24, %4 : vector<4x512xf32>
    %26 = arith.addf %24, %4 : vector<4x512xf32>
    %cst_9 = arith.constant 2.000000e+00 : f32
    %27 = vector.broadcast %cst_9 : f32 to vector<4x512xf32>
    %28 = arith.mulf %27, %25 : vector<4x512xf32>
    %29 = arith.subf %26, %28 : vector<4x512xf32>
    %30 = arith.mulf %29, %29 : vector<4x512xf32>
    %31 = arith.mulf %30, %17 : vector<4x512xf32>
    %c0_10 = arith.constant 0 : index
    %c0_11 = arith.constant 0 : index
    %32 = vector.load %arg5[%c0_10, %c0_11] : memref<4x512xf32, #tpu.memory_space<vmem>>, vector<4x512xf32>
    %33 = arith.addf %32, %31 : vector<4x512xf32>
    %c0_12 = arith.constant 0 : index
    %c0_13 = arith.constant 0 : index
    %34 = vector.load %arg5[%c0_12, %c0_13] : memref<4x512xf32, #tpu.memory_space<vmem>>, vector<4x512xf32>
    tpu.vector_store %arg5[%c0_12, %c0_13], %33 {strides = array<i32>} : memref<4x512xf32, #tpu.memory_space<vmem>>, vector<4x512xf32>,
    %c0_14 = arith.constant 0 : index
    %c0_15 = arith.constant 0 : index
    %35 = vector.load %arg6[%c0_14, %c0_15] : memref<4x512xf32, #tpu.memory_space<vmem>>, vector<4x512xf32>
    %36 = arith.addf %35, %25 : vector<4x512xf32>
    %c0_16 = arith.constant 0 : index
    %c0_17 = arith.constant 0 : index
    %37 = vector.load %arg6[%c0_16, %c0_17] : memref<4x512xf32, #tpu.memory_space<vmem>>, vector<4x512xf32>
    tpu.vector_store %arg6[%c0_16, %c0_17], %36 {strides = array<i32>} : memref<4x512xf32, #tpu.memory_space<vmem>>, vector<4x512xf32>,
    %c0_18 = arith.constant 0 : index
    %c0_19 = arith.constant 0 : index
    %38 = vector.load %arg7[%c0_18, %c0_19] : memref<4x512xf32, #tpu.memory_space<vmem>>, vector<4x512xf32>
    %39 = arith.addf %38, %26 : vector<4x512xf32>
    %c0_20 = arith.constant 0 : index
    %c0_21 = arith.constant 0 : index
    %40 = vector.load %arg7[%c0_20, %c0_21] : memref<4x512xf32, #tpu.memory_space<vmem>>, vector<4x512xf32>
    tpu.vector_store %arg7[%c0_20, %c0_21], %39 {strides = array<i32>} : memref<4x512xf32, #tpu.memory_space<vmem>>, vector<4x512xf32>,
    %c0_i32_22 = arith.constant 0 : i32
    %41 = arith.cmpi eq, %arg1, %c0_i32_22 : i32
    %42 = arith.extui %41 : i1 to i32
    %c0_i32_23 = arith.constant 0 : i32
    %43 = arith.cmpi ne, %42, %c0_i32_23 : i32
    scf.if %43 {
      %c0_24 = arith.constant 0 : index
      %c0_25 = arith.constant 0 : index
      %44 = vector.load %arg5[%c0_24, %c0_25] : memref<4x512xf32, #tpu.memory_space<vmem>>, vector<4x512xf32>
      %45 = vector.shape_cast %44 : vector<4x512xf32> to vector<1x4x512xf32>
      %cst_26 = arith.constant dense<0.000000e+00> : vector<1xf32>
      %46 = vector.multi_reduction <add>, %45, %cst_26 [1, 2] : vector<1x4x512xf32> to vector<1xf32>
      %47 = vector.shape_cast %46 : vector<1xf32> to vector<1x1x1xf32>
      %48 = vector.extract %47[0, 0, 0] : f32 from vector<1x1x1xf32>
      %c0_27 = arith.constant 0 : index
      %c0_28 = arith.constant 0 : index
      %49 = vector.load %arg6[%c0_27, %c0_28] : memref<4x512xf32, #tpu.memory_space<vmem>>, vector<4x512xf32>
      %50 = vector.shape_cast %49 : vector<4x512xf32> to vector<1x4x512xf32>
      %cst_29 = arith.constant dense<0.000000e+00> : vector<1xf32>
      %51 = vector.multi_reduction <add>, %50, %cst_29 [1, 2] : vector<1x4x512xf32> to vector<1xf32>
      %52 = vector.shape_cast %51 : vector<1xf32> to vector<1x1x1xf32>
      %53 = vector.extract %52[0, 0, 0] : f32 from vector<1x1x1xf32>
      %c0_30 = arith.constant 0 : index
      %c0_31 = arith.constant 0 : index
      %54 = vector.load %arg7[%c0_30, %c0_31] : memref<4x512xf32, #tpu.memory_space<vmem>>, vector<4x512xf32>
      %55 = vector.shape_cast %54 : vector<4x512xf32> to vector<1x4x512xf32>
      %cst_32 = arith.constant dense<0.000000e+00> : vector<1xf32>
      %56 = vector.multi_reduction <add>, %55, %cst_32 [1, 2] : vector<1x4x512xf32> to vector<1xf32>
      %57 = vector.shape_cast %56 : vector<1xf32> to vector<1x1x1xf32>
      %58 = vector.extract %57[0, 0, 0] : f32 from vector<1x1x1xf32>
      %59 = tpu.iota {dimensions = array<i32: 1>} : vector<1x8x128xi32>
      %c0_i32_33 = arith.constant 0 : i32
      %60 = vector.broadcast %c0_i32_33 : i32 to vector<1x8x128xi32>
      %61 = arith.cmpi eq, %59, %60 : vector<1x8x128xi32>
      %c1_i32 = arith.constant 1 : i32
      %62 = vector.broadcast %c1_i32 : i32 to vector<1x8x128xi32>
      %63 = arith.cmpi eq, %59, %62 : vector<1x8x128xi32>
      %c2_i32 = arith.constant 2 : i32
      %64 = vector.broadcast %c2_i32 : i32 to vector<1x8x128xi32>
      %65 = arith.cmpi eq, %59, %64 : vector<1x8x128xi32>
      %cst_34 = arith.constant 0.000000e+00 : f32
      %66 = vector.broadcast %58 : f32 to vector<1x8x128xf32>
      %67 = vector.broadcast %cst_34 : f32 to vector<1x8x128xf32>
      %68 = arith.select %65, %66, %67 : vector<1x8x128xi1>, vector<1x8x128xf32>
      %69 = vector.broadcast %53 : f32 to vector<1x8x128xf32>
      %70 = arith.select %63, %69, %68 : vector<1x8x128xi1>, vector<1x8x128xf32>
      %71 = vector.broadcast %48 : f32 to vector<1x8x128xf32>
      %72 = arith.select %61, %71, %70 : vector<1x8x128xi1>, vector<1x8x128xf32>
      %c0_35 = arith.constant 0 : index
      %c0_36 = arith.constant 0 : index
      %c0_37 = arith.constant 0 : index
      %73 = vector.load %arg4[%c0_35, %c0_36, %c0_37] : memref<1x8x128xf32, #tpu.memory_space<vmem>>, vector<1x8x128xf32>
      tpu.vector_store %arg4[%c0_35, %c0_36, %c0_37], %72 {strides = array<i32>} : memref<1x8x128xf32, #tpu.memory_space<vmem>>, vector<1x8x128xf32>,
    } else {
    }
    return
  }
  func.func @transform_0(%arg0: i32, %arg1: i32) -> (i32, i32) {
    %c1_i32 = arith.constant 1 : i32
    %0 = arith.muli %arg0, %c1_i32 : i32
    %1 = arith.addi %0, %arg1 : i32
    %c0_i32 = arith.constant 0 : i32
    %2 = arith.minsi %1, %c0_i32 : i32
    %c0_i32_0 = arith.constant 0 : i32
    %c0_i32_1 = arith.constant 0 : i32
    return %2, %c0_i32_0 : i32, i32
  }
  func.func @transform_1(%arg0: i32, %arg1: i32) -> (i32, i32) {
    %c1_i32 = arith.constant 1 : i32
    %0 = arith.muli %arg0, %c1_i32 : i32
    %1 = arith.addi %0, %arg1 : i32
    %c0_i32 = arith.constant 0 : i32
    %2 = arith.minsi %1, %c0_i32 : i32
    %c0_i32_0 = arith.constant 0 : i32
    %c0_i32_1 = arith.constant 0 : i32
    return %2, %c0_i32_0 : i32, i32
  }
  func.func @transform_2(%arg0: i32, %arg1: i32) -> (i32, i32, i32) {
    %c0_i32 = arith.constant 0 : i32
    %c0_i32_0 = arith.constant 0 : i32
    %c0_i32_1 = arith.constant 0 : i32
    return %arg0, %c0_i32, %c0_i32_0 : i32, i32, i32
  }
}

</mosaic_0001>

<llo_original>
// kernel: tpu_custom_call.1
$region0: #{tpu_custom_call.1}
  #allocation0 [shape = 'u32[]', space=smem, size = 0x4, offset = 0x4, fixed_abs, tag = 'smem constant byte address 0x4 - core index']
  #allocation1 [shape = 'u32[72,128]{1,0:T(1,128)}', space=vmem, size = 0x9000, scoped, tag = 'internal scratch']
  #allocation2 [shape = 'f32[4,512]{1,0:T(4,128)}', space=vmem, size = 0x2000, scoped, tag = 'scratch operand']
  #allocation3 [shape = 'f32[4,512]{1,0:T(4,128)}', space=vmem, size = 0x2000, scoped, tag = 'scratch operand']
  #allocation4 [shape = 'f32[4,512]{1,0:T(4,128)}', space=vmem, size = 0x2000, scoped, tag = 'scratch operand']
  %s0 = inlined_call_operand.hbm [shape: f32[4,512], index: 0, kind: input, shape index: {}]
  %s1 = inlined_call_operand.hbm [shape: f32[4,512], index: 1, kind: input, shape index: {}]
  %s2 = inlined_call_operand.hbm [shape: f32[1,8,128], index: 2, kind: output, shape index: {}]
  %s3 = sld [smem:[#allocation0]]
  $region34: #{tpu_custom_call.1} parent=0
    _
  %s5 = ssub.s32 1, %s3
  %s6 = scalar_select 0, %s5, %s3
  $region1: #{tpu_custom_call.1} parent=0
    #allocation5 [shape = 'u8[8192]{0}', space=vmem, size = 0x2000, scoped, tag = 'input window, operand 0, single buffered']
    #allocation6 [shape = 's32[1]{0}', space=sflag, size = 0x4, scoped, tag = 'scoped memory for tpu_custom_call.1']
    #allocation7 [shape = 's32[1]{0}', space=sflag, size = 0x4, scoped, tag = 'scoped memory for tpu_custom_call.1']
    #allocation8 [shape = 'u8[8192]{0}', space=vmem, size = 0x2000, scoped, tag = 'input window, operand 1, single buffered']
    #allocation9 [shape = 's32[1]{0}', space=sflag, size = 0x4, scoped, tag = 'scoped memory for tpu_custom_call.1']
    #allocation10 [shape = 'u8[4096]{0}', space=vmem, size = 0x1000, scoped, tag = 'output window, operand 0, single buffered']
    %7 = vsyncpa [#allocation6], 0
    %8 = vsyncpa [#allocation9], 0
    %9 = vsyncpa [#allocation7], 0
    // Predicated region
    $region2: #{tpu_custom_call.1} parent=1 // pred_check
      _
    $region3: #{tpu_custom_call.1} parent=1 // pred_check_branch
      %11 = sbr.rel (0) target = $region5
    $region4: #{tpu_custom_call.1} parent=1 // pred_region
      %s12 = sadd.s32 0, 0
      %p13 = scmp.lt.s32.totalorder %s12, 0
      %s14 = scalar_select %p13, %s12, 0
      %16 = vsyncadd [#allocation6], 0
      %s17 = smul.addr %s14, 4
      %s18 = smul.addr %s17, 4
      %s19 = scalar_lea.hbm %s0, %s18
      %s21 = sshll.u32 %s19, 4
      %s22 = int_to_ptr.hbm [resolvable:$true] %s21
      %s23 = sshll.u32 [#allocation5], 4
      %s24 = int_to_ptr.vmem [resolvable:$true] %s23
      %26 = dma.hbm_to_vmem [thread:$0]  %s22, 256, %s24, [#allocation6]
    $region5: #{tpu_custom_call.1} parent=1 // pred_fallthru
      _
    // Predicated region
    $region6: #{tpu_custom_call.1} parent=1 // pred_check
      _
    $region7: #{tpu_custom_call.1} parent=1 // pred_check_branch
      %28 = sbr.rel (0) target = $region9
    $region8: #{tpu_custom_call.1} parent=1 // pred_region
      %s29 = sadd.s32 0, 0
      %p30 = scmp.lt.s32.totalorder %s29, 0
      %s31 = scalar_select %p30, %s29, 0
      %33 = vsyncadd [#allocation9], 0
      %s34 = smul.addr %s31, 4
      %s35 = smul.addr %s34, 4
      %s36 = scalar_lea.hbm %s1, %s35
      %s38 = sshll.u32 %s36, 4
      %s39 = int_to_ptr.hbm [resolvable:$true] %s38
      %s40 = sshll.u32 [#allocation8], 4
      %s41 = int_to_ptr.vmem [resolvable:$true] %s40
      %43 = dma.hbm_to_vmem [thread:$0]  %s39, 256, %s41, [#allocation9]
    $region9: #{tpu_custom_call.1} parent=1 // pred_fallthru
      _
    // Predicated region
    $region10: #{tpu_custom_call.1} parent=1 // pred_check
      _
    $region11: #{tpu_custom_call.1} parent=1 // pred_check_branch
      %45 = sbr.rel (0) target = $region13
    $region12: #{tpu_custom_call.1} parent=1 // pred_region
      %47 = dma.done [#allocation6], 256
    $region13: #{tpu_custom_call.1} parent=1 // pred_fallthru
      _
    // Predicated region
    $region14: #{tpu_custom_call.1} parent=1 // pred_check
      _
    $region15: #{tpu_custom_call.1} parent=1 // pred_check_branch
      %49 = sbr.rel (0) target = $region17
    $region16: #{tpu_custom_call.1} parent=1 // pred_region
      %51 = dma.done [#allocation9], 256
    $region17: #{tpu_custom_call.1} parent=1 // pred_fallthru
      _
    %s52 = sadd.s32 0, 0
    %p53 = scmp.lt.s32.totalorder %s52, 0
    %s54 = scalar_select %p53, %s52, 0
    %s55 = sadd.s32 0, 0
    %p56 = scmp.lt.s32.totalorder %s55, 0
    %s57 = scalar_select %p56, %s55, 0
    %p58 = scmp.eq.s32.totalorder 0, 0
    // Predicated region
    $region18: #{tpu_custom_call.1} parent=1 // pred_check
      %p59 = pneg %p58
    $region19: #{tpu_custom_call.1} parent=1 // pred_check_branch
      %61 = sbr.rel (%p59) target = $region21
    $region20: #{tpu_custom_call.1} parent=1 // pred_region
      %62 = vst [vmem:[#allocation2] sm:$0xff] 0.0
      %63 = vst [vmem:[#allocation2 + $0x8] sm:$0xff] 0.0
      %64 = vst [vmem:[#allocation3] sm:$0xff] 0.0
      %65 = vst [vmem:[#allocation3 + $0x8] sm:$0xff] 0.0
      %66 = vst [vmem:[#allocation4] sm:$0xff] 0.0
      %67 = vst [vmem:[#allocation4 + $0x8] sm:$0xff] 0.0
    $region21: #{tpu_custom_call.1} parent=1 // pred_fallthru
      _
    %v68 = vld [vmem:[#allocation5] sm:$0xff]
    %v69 = vld [vmem:[#allocation5 + $0x8] sm:$0xff]
    %v70 = vld [vmem:[#allocation8] sm:$0xff]
    %v71 = vld [vmem:[#allocation8 + $0x8] sm:$0xff]
    %v72 = vand.u32 2147483647, %v68
    %v73 = vand.u32 2147483647, %v69
    %v74 = vsub.f32 0.0, %v72
    %v75 = vsub.f32 0.0, %v73
    %v76 = vmul.f32 %v74, 1.442695
    %v77 = vpow.pop %v76
    %v78 = vmul.f32 %v75, 1.442695
    %v79 = vpow.pop %v78
    %v80 = vadd.f32 %v77, 1.0
    %v81 = vlog2.pop %v80
    %v82 = vmul.f32 %v81, 0.6931472
    %v83 = vmul.f32 -0.5, %v77
    %v84 = vadd.f32 %v83, 1.0
    %v85 = vmul.f32 %v84, %v77
    %v86 = vand.u32 2147483647, %v77
    %vm87 = vcmp.lt.f32.partialorder %v86, 0.0004427343
    %v88 = vsel %vm87, %v85, %v82
    %v89 = vadd.f32 %v79, 1.0
    %v90 = vlog2.pop %v89
    %v91 = vmul.f32 %v90, 0.6931472
    %v92 = vmul.f32 -0.5, %v79
    %v93 = vadd.f32 %v92, 1.0
    %v94 = vmul.f32 %v93, %v79
    %v95 = vand.u32 2147483647, %v79
    %vm96 = vcmp.lt.f32.partialorder %v95, 0.0004427343
    %v97 = vsel %vm96, %v94, %v91
    %v98 = vsub.f32 0.0, %v68
    %v99 = vsub.f32 0.0, %v69
    %v100 = vmax.f32 %v98, 0.0
    %v101 = vmax.f32 %v99, 0.0
    %v102 = vmul.f32 %v68, %v70
    %v103 = vmul.f32 %v69, %v71
    %v104 = vsub.f32 %v68, %v102
    %v105 = vsub.f32 %v69, %v103
    %v106 = vadd.f32 %v104, %v100
    %v107 = vadd.f32 %v105, %v101
    %v108 = vadd.f32 %v106, %v88
    %v109 = vadd.f32 %v107, %v97
    %vm110 = vcmp.ge.f32.partialorder %v68, 0.0
    %vm111 = vcmp.ge.f32.partialorder %v69, 0.0
    %v112 = vsel %vm110, 1.0, %v77
    %v113 = vsel %vm111, 1.0, %v79
    %v114 = vadd.f32 %v77, 1.0
    %v115 = vadd.f32 %v79, 1.0
    %v116 = vrcp.pop %v114
    %v117 = vmul.f32 %v114, %v116
    %v118 = vsub.f32 1.0, %v117
    %v119 = vmul.f32 %v116, %v118
    %v120 = vadd.f32 %v116, %v119
    %vm121 = vweird.f32 %v114
    %vm122 = vweird.f32 %v116
    %vm123 = vmor %vm121, %vm122
    %v124 = vsel %vm123, %v116, %v120
    %v125 = vand.u32 2147483647, %v114
    %vm126 = vcmp.eq.f32.partialorder %v125, 8.507059e+37
    %v127 = vand.u32 %v114, 2147483648
    %v128 = vor.u32 1.1754944e-38, %v127
    %v129 = vsel %vm126, %v128, %v124
    %v130 = vmul.f32 %v112, %v129
    %v131 = vrcp.pop %v115
    %v132 = vmul.f32 %v115, %v131
    %v133 = vsub.f32 1.0, %v132
    %v134 = vmul.f32 %v131, %v133
    %v135 = vadd.f32 %v131, %v134
    %vm136 = vweird.f32 %v115
    %vm137 = vweird.f32 %v131
    %vm138 = vmor %vm136, %vm137
    %v139 = vsel %vm138, %v131, %v135
    %v140 = vand.u32 2147483647, %v115
    %vm141 = vcmp.eq.f32.partialorder %v140, 8.507059e+37
    %v142 = vand.u32 %v115, 2147483648
    %v143 = vor.u32 1.1754944e-38, %v142
    %v144 = vsel %vm141, %v143, %v139
    %v145 = vmul.f32 %v113, %v144
    %v146 = vmul.f32 %v130, %v70
    %v147 = vmul.f32 %v145, %v71
    %v148 = vadd.f32 %v130, %v70
    %v149 = vadd.f32 %v145, %v71
    %v150 = vmul.f32 %v146, 2.0
    %v151 = vmul.f32 %v147, 2.0
    %v152 = vsub.f32 %v148, %v150
    %v153 = vsub.f32 %v149, %v151
    %v154 = vmul.f32 %v152, %v152
    %v155 = vmul.f32 %v153, %v153
    %v156 = vmul.f32 %v154, %v108
    %v157 = vmul.f32 %v155, %v109
    %v158 = vld [vmem:[#allocation2] sm:$0xff]
    %v159 = vld [vmem:[#allocation2 + $0x8] sm:$0xff]
    %v160 = vadd.f32 %v158, %v156
    %v161 = vadd.f32 %v159, %v157
    %162 = vst [vmem:[#allocation2] sm:$0xff] %v160
    %163 = vst [vmem:[#allocation2 + $0x8] sm:$0xff] %v161
    %v164 = vld [vmem:[#allocation3] sm:$0xff]
    %v165 = vld [vmem:[#allocation3 + $0x8] sm:$0xff]
    %v166 = vadd.f32 %v164, %v146
    %v167 = vadd.f32 %v165, %v147
    %168 = vst [vmem:[#allocation3] sm:$0xff] %v166
    %169 = vst [vmem:[#allocation3 + $0x8] sm:$0xff] %v167
    %v170 = vld [vmem:[#allocation4] sm:$0xff]
    %v171 = vld [vmem:[#allocation4 + $0x8] sm:$0xff]
    %v172 = vadd.f32 %v170, %v148
    %v173 = vadd.f32 %v171, %v149
    %174 = vst [vmem:[#allocation4] sm:$0xff] %v172
    %175 = vst [vmem:[#allocation4 + $0x8] sm:$0xff] %v173
    // Predicated region
    $region22: #{tpu_custom_call.1} parent=1 // pred_check
      %p176 = pneg %p58
    $region23: #{tpu_custom_call.1} parent=1 // pred_check_branch
      %178 = sbr.rel (%p176) target = $region25
    $region24: #{tpu_custom_call.1} parent=1 // pred_region
      %v179 = vld [vmem:[#allocation2] sm:$0xff]
      %v180 = vld [vmem:[#allocation2 + $0x8] sm:$0xff]
      %183 = vst [vmem:[#allocation1] ss:$2 sm:$0xff] %v179
      %s184 = scalar_lea.vmem [#allocation1], 16
      %185 = vst [vmem:[%s184] ss:$2 sm:$0xff] %v180
      %v186 = vld.sshfl [vmem:[#allocation1] sm:$0xff pattern:$0x75316420]
      %v187 = vld.sshfl [vmem:[#allocation1 + $0x8] sm:$0xff pattern:$0x75316420]
      %v188 = vld.sshfl [vmem:[#allocation1 + $0x10] sm:$0xff pattern:$0x75316420]
      %v189 = vld.sshfl [vmem:[#allocation1 + $0x18] sm:$0xff pattern:$0x75316420]
      %vm194 = vcmask 1043456
      %v195 = vsel %vm194, %v186, 0.0
      %v196 = vsel %vm194, %v187, 0.0
      %v197 = vadd.f32 %v195, %v196
      %v198 = vsel %vm194, %v188, 0.0
      %v199 = vadd.f32 %v197, %v198
      %v200 = vsel %vm194, %v189, 0.0
      %v201 = vadd.f32 %v199, %v200
      %202 = vadd.xlane.f32.xlu0 %v201
      %v203 = vpop.xlane.xlu0 %202
      %v204 = vrot.slane %v203, 4
      %v205 = vadd.f32 %v203, %v204
      %v206 = vrot.slane %v205, 2
      %v207 = vadd.f32 %v205, %v206
      %v208 = vrot.slane %v207, 1
      %v209 = vadd.f32 %v207, %v208
      %s210 = vtos %v209
      %v211 = vld [vmem:[#allocation3] sm:$0xff]
      %v212 = vld [vmem:[#allocation3 + $0x8] sm:$0xff]
      %215 = vst [vmem:[#allocation1] ss:$2 sm:$0xff] %v211
      %s216 = scalar_lea.vmem [#allocation1], 16
      %217 = vst [vmem:[%s216] ss:$2 sm:$0xff] %v212
      %v218 = vld.sshfl [vmem:[#allocation1] sm:$0xff pattern:$0x75316420]
      %v219 = vld.sshfl [vmem:[#allocation1 + $0x8] sm:$0xff pattern:$0x75316420]
      %v220 = vld.sshfl [vmem:[#allocation1 + $0x10] sm:$0xff pattern:$0x75316420]
      %v221 = vld.sshfl [vmem:[#allocation1 + $0x18] sm:$0xff pattern:$0x75316420]
      %v226 = vsel %vm194, %v218, 0.0
      %v227 = vsel %vm194, %v219, 0.0
      %v228 = vadd.f32 %v226, %v227
      %v229 = vsel %vm194, %v220, 0.0
      %v230 = vadd.f32 %v228, %v229
      %v231 = vsel %vm194, %v221, 0.0
      %v232 = vadd.f32 %v230, %v231
      %233 = vadd.xlane.f32.xlu0 %v232
      %v234 = vpop.xlane.xlu0 %233
      %v235 = vrot.slane %v234, 4
      %v236 = vadd.f32 %v234, %v235
      %v237 = vrot.slane %v236, 2
      %v238 = vadd.f32 %v236, %v237
      %v239 = vrot.slane %v238, 1
      %v240 = vadd.f32 %v238, %v239
      %s241 = vtos %v240
      %v242 = vld [vmem:[#allocation4] sm:$0xff]
      %v243 = vld [vmem:[#allocation4 + $0x8] sm:$0xff]
      %246 = vst [vmem:[#allocation1] ss:$2 sm:$0xff] %v242
      %s247 = scalar_lea.vmem [#allocation1], 16
      %248 = vst [vmem:[%s247] ss:$2 sm:$0xff] %v243
      %v249 = vld.sshfl [vmem:[#allocation1] sm:$0xff pattern:$0x75316420]
      %v250 = vld.sshfl [vmem:[#allocation1 + $0x8] sm:$0xff pattern:$0x75316420]
      %v251 = vld.sshfl [vmem:[#allocation1 + $0x10] sm:$0xff pattern:$0x75316420]
      %v252 = vld.sshfl [vmem:[#allocation1 + $0x18] sm:$0xff pattern:$0x75316420]
      %v257 = vsel %vm194, %v249, 0.0
      %v258 = vsel %vm194, %v250, 0.0
      %v259 = vadd.f32 %v257, %v258
      %v260 = vsel %vm194, %v251, 0.0
      %v261 = vadd.f32 %v259, %v260
      %v262 = vsel %vm194, %v252, 0.0
      %v263 = vadd.f32 %v261, %v262
      %264 = vadd.xlane.f32.xlu0 %v263
      %v265 = vpop.xlane.xlu0 %264
      %v266 = vrot.slane %v265, 4
      %v267 = vadd.f32 %v265, %v266
      %v268 = vrot.slane %v267, 2
      %v269 = vadd.f32 %v267, %v268
      %v270 = vrot.slane %v269, 1
      %v271 = vadd.f32 %v269, %v270
      %s272 = vtos %v271
      %v273 = vlaneseq
      %v274 = vshrl.u32 %v273, 7
      %vm275 = vcmp.eq.s32.totalorder %v274, 0
      %vm276 = vcmp.eq.s32.totalorder %v274, 1
      %vm277 = vcmp.eq.s32.totalorder %v274, 2
      %v278 = vstv %s272
      %v279 = vsel %vm277, %v278, 0.0
      %v280 = vstv %s241
      %v281 = vsel %vm276, %v280, %v279
      %v282 = vstv %s210
      %v283 = vsel %vm275, %v282, %v281
      %284 = vst [vmem:[#allocation10] sm:$0xff] %v283
    $region25: #{tpu_custom_call.1} parent=1 // pred_fallthru
      _
    // Predicated region
    $region26: #{tpu_custom_call.1} parent=1 // pred_check
      _
    $region27: #{tpu_custom_call.1} parent=1 // pred_check_branch
      %286 = sbr.rel (0) target = $region29
    $region28: #{tpu_custom_call.1} parent=1 // pred_region
      %288 = vsyncadd [#allocation7], 0
      %s290 = sshll.u32 [#allocation10], 4
      %s291 = int_to_ptr.vmem [resolvable:$true] %s290
      %s292 = sshll.u32 %s2, 4
      %s293 = int_to_ptr.hbm [resolvable:$true] %s292
      %295 = dma.vmem_to_hbm [thread:$0]  %s291, 128, %s293, [#allocation7]
    $region29: #{tpu_custom_call.1} parent=1 // pred_fallthru
      _
    // Predicated region
    $region30: #{tpu_custom_call.1} parent=1 // pred_check
      _
    $region31: #{tpu_custom_call.1} parent=1 // pred_check_branch
      %297 = sbr.rel (0) target = $region33
    $region32: #{tpu_custom_call.1} parent=1 // pred_region
      %299 = dma.done [#allocation7], 128
    $region33: #{tpu_custom_call.1} parent=1 // pred_fallthru
      _
    %300 = vsyncpa [#allocation6], 1
    %301 = vsyncpa [#allocation9], 1
    %302 = vsyncpa [#allocation7], 1

</llo_original>
